<compile_context>
chip_gen: v6e
topology: v6e:2x2x1
jax: 0.10.0
libtpu: 0.0.40
codegen_flags: <defaults>
</compile_context>

<pallas_src>
import jax
import jax.numpy as jnp
from jax.experimental import pallas as pl
from jax.experimental.pallas import tpu as pltpu

_LANE = 128
_TARGET_BLOCK_BYTES = 4 * 1024 * 1024   # ~4 MiB/block; in+out double-buffered ~= 16 MiB VMEM


def _affine_kernel(h_ref, s_ref, b_ref, out_ref):
    # s/b are the same (1, lane) block every grid step (constant index_map);
    # rely on implicit jnp broadcasting -- no explicit broadcast inside the loop.
    h = h_ref[...].astype(jnp.float32)
    s = s_ref[...].astype(jnp.float32)
    b = b_ref[...].astype(jnp.float32)
    out_ref[...] = (s * h + b).astype(out_ref.dtype)


def _pick_tile_rows(rows, lane_dim, itemsize):
    t = _TARGET_BLOCK_BYTES // max(1, lane_dim * itemsize)
    t = max(8, (t // 8) * 8)          # sublane-aligned
    if t >= rows:
        return rows                   # single full-extent block (always legal)
    return t


def actnorm_forward(h, s, b):
    """Pallas ActNorm forward. h: (N, dim); s, b: (1, dim). Returns (h_out, logdet)."""
    N, dim = h.shape
    assert s.shape == (1, dim) and b.shape == (1, dim)
    out_dtype = h.dtype

    # ---- lane-densify: view (N, dim) as (N*dim/128, 128) when dim | 128 ----
    if dim < _LANE and _LANE % dim == 0 and N % (_LANE // dim) == 0:
        factor = _LANE // dim
        h2 = h.reshape(N // factor, _LANE)
        s2 = jnp.tile(s, (1, factor))
        b2 = jnp.tile(b, (1, factor))
    else:
        factor = 1
        h2, s2, b2 = h, s, b

    rows, lane_dim = h2.shape
    tile_rows = _pick_tile_rows(rows, lane_dim, jnp.dtype(out_dtype).itemsize)
    grid = (pl.cdiv(rows, tile_rows),)

    out2 = pl.pallas_call(
        _affine_kernel,
        out_shape=jax.ShapeDtypeStruct((rows, lane_dim), out_dtype),
        grid=grid,
        in_specs=[
            pl.BlockSpec((tile_rows, lane_dim), lambda i: (i, 0)),  # h  (streamed)
            pl.BlockSpec((1, lane_dim), lambda i: (0, 0)),          # s  (resident)
            pl.BlockSpec((1, lane_dim), lambda i: (0, 0)),          # b  (resident)
        ],
        out_specs=pl.BlockSpec((tile_rows, lane_dim), lambda i: (i, 0)),
        compiler_params=pltpu.CompilerParams(
            dimension_semantics=("parallel",),      # shard row grid across TCs (v7x)
            vmem_limit_bytes=48 * 1024 * 1024,      # headroom; still fits v7x's 64 MiB
        ),
    )(h2, s2, b2)

    h_out = out2.reshape(N, dim) if factor != 1 else out2

    # logdet = dim * sum(log|s|): parameter-only scalar work, hoisted out of the
    # kernel so the gridded inner loop is a pure streaming fma (matches module).
    logdet = jnp.float32(dim) * jnp.sum(jnp.log(jnp.abs(s.astype(jnp.float32))))
    return h_out, logdet


def _check(N, dim, key):
    k_h, k_s, k_b = jax.random.split(key, 3)
    h = jax.random.normal(k_h, (N, dim), dtype=jnp.float32)
    s = 1.0 + 0.1 * jax.random.normal(k_s, (1, dim), dtype=jnp.float32)
    b = 0.1 * jax.random.normal(k_b, (1, dim), dtype=jnp.float32)

    h_out, logdet = actnorm_forward(h, s, b)
    jax.block_until_ready((h_out, logdet))

    h_ref = s * h + b
    logdet_ref = dim * jnp.sum(jnp.log(jnp.abs(s)))

    assert h_out.shape == h.shape and h_out.dtype == h.dtype
    assert jnp.allclose(h_out, h_ref, atol=1e-5, rtol=1e-5), f"h mismatch N={N} dim={dim}"
    assert jnp.allclose(logdet, logdet_ref, atol=1e-5, rtol=1e-5), f"logdet mismatch N={N} dim={dim}"


if __name__ == "__main__":
    key = jax.random.PRNGKey(0)
    keys = jax.random.split(key, 3)

    # Small shape consistent with the module (batch=8, hidden=32): exercises
    # the lane-densified single-block path.
    _check(8, 32, keys[0])
    # Multi-block gridded path with a partial last block (lane-densified).
    _check(40000, 32, keys[1])
    # Fallback path (N not divisible by 128/dim -> no widening).
    _check(10, 32, keys[2])

    print("KERNEL_OK")
</pallas_src>

<mosaic_0001>
module attributes {stable_mosaic.version = 11 : i64} {
  func.func @_affine_kernel(%arg0: i32, %arg1: memref<2x128xf32, #tpu.memory_space<vmem>>, %arg2: memref<1x128xf32, #tpu.memory_space<vmem>>, %arg3: memref<1x128xf32, #tpu.memory_space<vmem>>, %arg4: memref<2x128xf32, #tpu.memory_space<vmem>>) attributes {dimension_semantics = [#tpu.dimension_semantics<parallel>], iteration_bounds = array<i64: 1>, scalar_prefetch = 0 : i64, scratch_operands = 0 : i64, tpu.core_type = #tpu.core_type<tc>, window_params = [{transform_indices = @transform_0, window_bounds = array<i64: 2, 128>}, {pipeline_mode = #tpu.pipeline_mode<synchronous>, transform_indices = @transform_1, window_bounds = array<i64: 1, 128>}, {pipeline_mode = #tpu.pipeline_mode<synchronous>, transform_indices = @transform_2, window_bounds = array<i64: 1, 128>}, {transform_indices = @transform_3, window_bounds = array<i64: 2, 128>}]} {
    %c0 = arith.constant 0 : index
    %c0_0 = arith.constant 0 : index
    %0 = vector.load %arg1[%c0, %c0_0] : memref<2x128xf32, #tpu.memory_space<vmem>>, vector<2x128xf32>
    %c0_1 = arith.constant 0 : index
    %c0_2 = arith.constant 0 : index
    %1 = vector.load %arg2[%c0_1, %c0_2] : memref<1x128xf32, #tpu.memory_space<vmem>>, vector<1x128xf32>
    %c0_3 = arith.constant 0 : index
    %c0_4 = arith.constant 0 : index
    %2 = vector.load %arg3[%c0_3, %c0_4] : memref<1x128xf32, #tpu.memory_space<vmem>>, vector<1x128xf32>
    %3 = vector.broadcast %1 : vector<1x128xf32> to vector<2x128xf32>
    %4 = arith.mulf %3, %0 : vector<2x128xf32>
    %5 = vector.broadcast %2 : vector<1x128xf32> to vector<2x128xf32>
    %6 = arith.addf %4, %5 : vector<2x128xf32>
    %c0_5 = arith.constant 0 : index
    %c0_6 = arith.constant 0 : index
    %7 = vector.load %arg4[%c0_5, %c0_6] : memref<2x128xf32, #tpu.memory_space<vmem>>, vector<2x128xf32>
    tpu.vector_store %arg4[%c0_5, %c0_6], %6 {strides = array<i32>} : memref<2x128xf32, #tpu.memory_space<vmem>>, vector<2x128xf32>,
    return
  }
  func.func @transform_0(%arg0: i32) -> (i32, i32) {
    %c0_i32 = arith.constant 0 : i32
    %c0_i32_0 = arith.constant 0 : i32
    return %arg0, %c0_i32 : i32, i32
  }
  func.func @transform_1(%arg0: i32) -> (i32, i32) {
    %c0_i32 = arith.constant 0 : i32
    %c0_i32_0 = arith.constant 0 : i32
    %c0_i32_1 = arith.constant 0 : i32
    return %c0_i32, %c0_i32_0 : i32, i32
  }
  func.func @transform_2(%arg0: i32) -> (i32, i32) {
    %c0_i32 = arith.constant 0 : i32
    %c0_i32_0 = arith.constant 0 : i32
    %c0_i32_1 = arith.constant 0 : i32
    return %c0_i32, %c0_i32_0 : i32, i32
  }
  func.func @transform_3(%arg0: i32) -> (i32, i32) {
    %c0_i32 = arith.constant 0 : i32
    %c0_i32_0 = arith.constant 0 : i32
    return %arg0, %c0_i32 : i32, i32
  }
}

</mosaic_0001>

<llo_original>
// kernel: tpu_custom_call.1
$region0: #{tpu_custom_call.1}
  #allocation0 [shape = 'u32[]', space=smem, size = 0x4, offset = 0x4, fixed_abs, tag = 'smem constant byte address 0x4 - core index']
  #allocation1 [shape = 'u32[144,128]{1,0:T(1,128)}', space=vmem, size = 0x12000, scoped, tag = 'internal scratch']
  %s0 = inlined_call_operand.hbm [shape: f32[2,128], index: 0, kind: input, shape index: {}]
  %s1 = inlined_call_operand.vmem [shape: f32[1,128], index: 1, kind: input, shape index: {}]
  %s2 = inlined_call_operand.vmem [shape: f32[1,128], index: 2, kind: input, shape index: {}]
  %s3 = inlined_call_operand.hbm [shape: f32[2,128], index: 3, kind: output, shape index: {}]
  %s4 = sld [smem:[#allocation0]]
  $region26: #{tpu_custom_call.1} parent=0
    _
  %s6 = ssub.s32 1, %s4
  %s7 = scalar_select 0, %s6, %s4
  $region1: #{tpu_custom_call.1} parent=0
    #allocation2 [shape = 'u8[1024]{0}', space=vmem, size = 0x400, scoped, tag = 'input window, operand 0, single buffered']
    #allocation3 [shape = 's32[1]{0}', space=sflag, size = 0x4, scoped, tag = 'scoped memory for tpu_custom_call.1']
    #allocation4 [shape = 's32[1]{0}', space=sflag, size = 0x4, scoped, tag = 'scoped memory for tpu_custom_call.1']
    #allocation5 [shape = 'u8[1024]{0}', space=vmem, size = 0x400, scoped, tag = 'output window, operand 0, single buffered']
    %8 = vsyncpa [#allocation3], 0
    %9 = vsyncpa [#allocation4], 0
    // Predicated region
    $region2: #{tpu_custom_call.1} parent=1 // pred_check
      _
    $region3: #{tpu_custom_call.1} parent=1 // pred_check_branch
      %11 = sbr.rel (0) target = $region5
    $region4: #{tpu_custom_call.1} parent=1 // pred_region
      %s13 = ssub.s32 32, 32
      %14 = vsyncadd [#allocation3], %s13
      %s16 = sshll.u32 [#allocation2], 4
      %s17 = int_to_ptr.vmem [resolvable:$true] %s16
      %19 = dma.hbm_to_vmem [thread:$0]  %s0, 32, %s17, [#allocation3]
    $region5: #{tpu_custom_call.1} parent=1 // pred_fallthru
      _
    // Predicated region
    $region6: #{tpu_custom_call.1} parent=1 // pred_check
      _
    $region7: #{tpu_custom_call.1} parent=1 // pred_check_branch
      %21 = sbr.rel (0) target = $region9
    $region8: #{tpu_custom_call.1} parent=1 // pred_region
      _
    $region9: #{tpu_custom_call.1} parent=1 // pred_fallthru
      _
    // Predicated region
    $region10: #{tpu_custom_call.1} parent=1 // pred_check
      _
    $region11: #{tpu_custom_call.1} parent=1 // pred_check_branch
      %23 = sbr.rel (0) target = $region13
    $region12: #{tpu_custom_call.1} parent=1 // pred_region
      _
    $region13: #{tpu_custom_call.1} parent=1 // pred_fallthru
      _
    // Predicated region
    $region14: #{tpu_custom_call.1} parent=1 // pred_check
      _
    $region15: #{tpu_custom_call.1} parent=1 // pred_check_branch
      %25 = sbr.rel (0) target = $region17
    $region16: #{tpu_custom_call.1} parent=1 // pred_region
      %26 = dma.done [#allocation3], 32
    $region17: #{tpu_custom_call.1} parent=1 // pred_fallthru
      _
    %v27 = vld [vmem:[#allocation2] sm:$0x3]
    %v28 = vld [vmem:[%s1] sm:$0x1]
    %v29 = vld [vmem:[%s2] sm:$0x1]
    %v31 = vlaneseq
    %v32 = vshrl.u32 %v31, 7
    %v33 = vsub.s32 0, %v32
    %v34 = vrot.slane %v28, %v33
    %v36 = vmul.f32 %v34, %v27
    %v38 = vlaneseq
    %v39 = vshrl.u32 %v38, 7
    %v40 = vsub.s32 0, %v39
    %v41 = vrot.slane %v29, %v40
    %v43 = vadd.f32 %v36, %v41
    %44 = vst [vmem:[#allocation5] sm:$0x3] %v43
    // Predicated region
    $region18: #{tpu_custom_call.1} parent=1 // pred_check
      _
    $region19: #{tpu_custom_call.1} parent=1 // pred_check_branch
      %46 = sbr.rel (0) target = $region21
    $region20: #{tpu_custom_call.1} parent=1 // pred_region
      %s48 = ssub.s32 32, 32
      %49 = vsyncadd [#allocation4], %s48
      %s51 = sshll.u32 [#allocation5], 4
      %s52 = int_to_ptr.vmem [resolvable:$true] %s51
      %54 = dma.vmem_to_hbm [thread:$0]  %s52, 32, %s3, [#allocation4]
    $region21: #{tpu_custom_call.1} parent=1 // pred_fallthru
      _
    // Predicated region
    $region22: #{tpu_custom_call.1} parent=1 // pred_check
      _
    $region23: #{tpu_custom_call.1} parent=1 // pred_check_branch
      %56 = sbr.rel (0) target = $region25
    $region24: #{tpu_custom_call.1} parent=1 // pred_region
      %57 = dma.done [#allocation4], 32
    $region25: #{tpu_custom_call.1} parent=1 // pred_fallthru
      _
    %58 = vsyncpa [#allocation3], 1
    %59 = vsyncpa [#allocation4], 1

</llo_original>
